<compile_context>
chip_gen: v7x
topology: tpu7x:2x2x1
jax: 0.10.0
libtpu: 0.0.40
codegen_flags: <defaults>
</compile_context>

<pallas_src>
import functools

import jax
import jax.numpy as jnp
from jax.experimental import pallas as pl
from jax.experimental.pallas import tpu as pltpu

IN_F = 6          # real input features
IN_PAD = 8        # padded contraction dim (full sublane loads)
HID = 64
OUT_F = 4         # real output classes
OUT_PAD = 128     # lane-dense output block width
NEG_BIG = -1e30   # bias padding value: padded logits -> exp() == 0


def policy_kernel(x_ref, w1_ref, b1_ref, w2_ref, b2_ref, o_ref):
    # Layer 1: [TB, 8] @ [8, 64] + [1, 64] -> ReLU
    h = jnp.dot(x_ref[...], w1_ref[...], preferred_element_type=jnp.float32)
    h = jnp.maximum(h + b1_ref[...], 0.0)

    # Layer 2: [TB, 64] @ [64, 128] + [1, 128]; lanes >= 4 carry a -1e30 bias
    logits = jnp.dot(h, w2_ref[...], preferred_element_type=jnp.float32)
    logits = logits + b2_ref[...]

    # Numerically-stable softmax over the padded 128 lanes (padded lanes give exp == 0,
    # so the result in lanes 0..3 is identical to softmax over the 4 real logits).
    m = jnp.max(logits, axis=-1, keepdims=True)
    e = jnp.exp(logits - m)
    denom = jnp.sum(e, axis=-1, keepdims=True)
    # Divide moved off the VALU slot onto the EUP reciprocal.
    o_ref[...] = (e * pl.reciprocal(denom, approx=False)).astype(o_ref.dtype)


def prepare_params(w1, b1, w2, b2):
    """One-time padding of the [in, out]-layout params (do this at init, not per call).

    w1: [6, 64]  -> [8, 64]   (zero rows; x is also zero-padded -> no numerical effect)
    w2: [64, 4]  -> [64, 128] (zero cols)
    b2: [1, 4]   -> [1, 128]  (-1e30 padding so padded softmax lanes are exactly 0)
    """
    w1p = jnp.zeros((IN_PAD, HID), jnp.float32).at[:IN_F, :].set(w1)
    b1p = jnp.asarray(b1, jnp.float32).reshape(1, HID)
    w2p = jnp.zeros((HID, OUT_PAD), jnp.float32).at[:, :OUT_F].set(w2)
    b2p = (jnp.full((1, OUT_PAD), NEG_BIG, jnp.float32)
           .at[:, :OUT_F].set(jnp.asarray(b2, jnp.float32).reshape(1, OUT_F)))
    return w1p, b1p, w2p, b2p


def _round_up(n, m):
    return ((n + m - 1) // m) * m


@functools.partial(jax.jit, static_argnames=("block_b",))
def policy_net_forward(x, params, block_b=512):
    """x: [B, 6] float32. params: output of prepare_params(). Returns [B, 4] probs."""
    w1p, b1p, w2p, b2p = params
    B = x.shape[0]

    # Batch tile: big row tiles at scale, shrunk (multiple of 8) for tiny batches.
    tb = min(block_b, _round_up(B, 8))
    b_pad = _round_up(B, tb)
    num_blocks = b_pad // tb

    # Pad batch to a multiple of the tile and the contraction dim 6 -> 8.
    xp = jnp.zeros((b_pad, IN_PAD), jnp.float32).at[:B, :IN_F].set(x)

    cost = pl.CostEstimate(
        flops=2 * b_pad * (IN_PAD * HID + HID * OUT_PAD),
        transcendentals=b_pad * (OUT_PAD + 1),
        bytes_accessed=4 * (b_pad * (IN_PAD + OUT_PAD)
                            + IN_PAD * HID + HID + HID * OUT_PAD + OUT_PAD),
    )

    out_padded = pl.pallas_call(
        policy_kernel,
        out_shape=jax.ShapeDtypeStruct((b_pad, OUT_PAD), jnp.float32),
        grid=(num_blocks,),
        in_specs=[
            pl.BlockSpec((tb, IN_PAD), lambda i: (i, 0)),    # x streams over the batch
            pl.BlockSpec((IN_PAD, HID), lambda i: (0, 0)),   # weights/biases stay resident
            pl.BlockSpec((1, HID), lambda i: (0, 0)),
            pl.BlockSpec((HID, OUT_PAD), lambda i: (0, 0)),
            pl.BlockSpec((1, OUT_PAD), lambda i: (0, 0)),
        ],
        out_specs=pl.BlockSpec((tb, OUT_PAD), lambda i: (i, 0)),  # lane-dense writeback
        compiler_params=pltpu.CompilerParams(
            dimension_semantics=("parallel",),
        ),
        cost_estimate=cost,
    )(xp, w1p, b1p, w2p, b2p)

    # Slice back to the real batch and the 4 real classes.
    return out_padded[:B, :OUT_F]


def init_params(key):
    # Deterministic synthetic init (shapes of nn.Linear(6,64) / nn.Linear(64,4)).
    k1, k2, k3, k4 = jax.random.split(key, 4)
    w1 = jax.random.normal(k1, (6, 64), jnp.float32) * 0.1   # [in, out]
    b1 = jax.random.normal(k2, (1, 64), jnp.float32) * 0.1
    w2 = jax.random.normal(k3, (64, 4), jnp.float32) * 0.1
    b2 = jax.random.normal(k4, (1, 4), jnp.float32) * 0.1
    return w1, b1, w2, b2


if __name__ == "__main__":
    key = jax.random.PRNGKey(0)
    kx, kp = jax.random.split(key)

    B = 8
    x = jax.random.normal(kx, (B, 6), jnp.float32)
    w1, b1, w2, b2 = init_params(kp)
    params = prepare_params(w1, b1, w2, b2)   # one-time weight padding

    out = policy_net_forward(x, params)
    out = jax.block_until_ready(out)

    # Reference check in plain JAX (un-padded params).
    h_ref = jnp.maximum(x @ w1 + b1, 0.0)
    logits_ref = h_ref @ w2 + b2
    ref = jax.nn.softmax(logits_ref, axis=-1)
    assert out.shape == (B, 4)
    assert jnp.allclose(out, ref, atol=1e-5, rtol=1e-5)
    assert jnp.allclose(jnp.sum(out, axis=-1), 1.0, atol=1e-5)

    print("KERNEL_OK")
</pallas_src>

<mosaic_0001>
module attributes {stable_mosaic.version = 11 : i64} {
  func.func @policy_kernel(%arg0: i32, %arg1: memref<8x8xf32, #tpu.memory_space<vmem>>, %arg2: memref<8x64xf32, #tpu.memory_space<vmem>>, %arg3: memref<1x64xf32, #tpu.memory_space<vmem>>, %arg4: memref<64x128xf32, #tpu.memory_space<vmem>>, %arg5: memref<1x128xf32, #tpu.memory_space<vmem>>, %arg6: memref<8x128xf32, #tpu.memory_space<vmem>>) attributes {dimension_semantics = [#tpu.dimension_semantics<parallel>], iteration_bounds = array<i64: 1>, scalar_prefetch = 0 : i64, scratch_operands = 0 : i64, tpu.core_type = #tpu.core_type<tc>, window_params = [{transform_indices = @transform_0, window_bounds = array<i64: 8, 8>}, {pipeline_mode = #tpu.pipeline_mode<synchronous>, transform_indices = @transform_1, window_bounds = array<i64: 8, 64>}, {pipeline_mode = #tpu.pipeline_mode<synchronous>, transform_indices = @transform_2, window_bounds = array<i64: 1, 64>}, {pipeline_mode = #tpu.pipeline_mode<synchronous>, transform_indices = @transform_3, window_bounds = array<i64: 64, 128>}, {pipeline_mode = #tpu.pipeline_mode<synchronous>, transform_indices = @transform_4, window_bounds = array<i64: 1, 128>}, {transform_indices = @transform_5, window_bounds = array<i64: 8, 128>}]} {
    %c0 = arith.constant 0 : index
    %c0_0 = arith.constant 0 : index
    %0 = vector.load %arg1[%c0, %c0_0] : memref<8x8xf32, #tpu.memory_space<vmem>>, vector<8x8xf32>
    %c0_1 = arith.constant 0 : index
    %c0_2 = arith.constant 0 : index
    %1 = vector.load %arg2[%c0_1, %c0_2] : memref<8x64xf32, #tpu.memory_space<vmem>>, vector<8x64xf32>
    %cst = arith.constant dense<0.000000e+00> : vector<8x64xf32>
    %2 = tpu.matmul %0, %1, %cst {dimension_numbers = #tpu.dot_dimension_numbers<[1], [0], [0], [1], [0, 0, 1, 1], [], []>} : vector<8x8xf32>, vector<8x64xf32>, vector<8x64xf32> -> vector<8x64xf32>
    %c0_3 = arith.constant 0 : index
    %c0_4 = arith.constant 0 : index
    %3 = vector.load %arg3[%c0_3, %c0_4] : memref<1x64xf32, #tpu.memory_space<vmem>>, vector<1x64xf32>
    %4 = vector.broadcast %3 : vector<1x64xf32> to vector<8x64xf32>
    %5 = arith.addf %2, %4 : vector<8x64xf32>
    %cst_5 = arith.constant 0.000000e+00 : f32
    %6 = vector.broadcast %cst_5 : f32 to vector<8x64xf32>
    %7 = arith.maximumf %5, %6 : vector<8x64xf32>
    %c0_6 = arith.constant 0 : index
    %c0_7 = arith.constant 0 : index
    %8 = vector.load %arg4[%c0_6, %c0_7] : memref<64x128xf32, #tpu.memory_space<vmem>>, vector<64x128xf32>
    %cst_8 = arith.constant dense<0.000000e+00> : vector<8x128xf32>
    %9 = tpu.matmul %7, %8, %cst_8 {dimension_numbers = #tpu.dot_dimension_numbers<[1], [0], [0], [1], [0, 0, 1, 1], [], []>} : vector<8x64xf32>, vector<64x128xf32>, vector<8x128xf32> -> vector<8x128xf32>
    %c0_9 = arith.constant 0 : index
    %c0_10 = arith.constant 0 : index
    %10 = vector.load %arg5[%c0_9, %c0_10] : memref<1x128xf32, #tpu.memory_space<vmem>>, vector<1x128xf32>
    %11 = vector.broadcast %10 : vector<1x128xf32> to vector<8x128xf32>
    %12 = arith.addf %9, %11 : vector<8x128xf32>
    %cst_11 = arith.constant dense<0xFF800000> : vector<8xf32>
    %13 = vector.multi_reduction <maximumf>, %12, %cst_11 [1] : vector<8x128xf32> to vector<8xf32>
    %14 = vector.shape_cast %13 : vector<8xf32> to vector<8x1xf32>
    %15 = vector.broadcast %14 : vector<8x1xf32> to vector<8x128xf32>
    %16 = arith.subf %12, %15 : vector<8x128xf32>
    %17 = math.exp %16 : vector<8x128xf32>
    %cst_12 = arith.constant dense<0.000000e+00> : vector<8xf32>
    %18 = vector.multi_reduction <add>, %17, %cst_12 [1] : vector<8x128xf32> to vector<8xf32>
    %19 = vector.shape_cast %18 : vector<8xf32> to vector<8x1xf32>
    %20 = tpu.reciprocal %19 : vector<8x1xf32> -> vector<8x1xf32>
    %21 = vector.broadcast %20 : vector<8x1xf32> to vector<8x128xf32>
    %22 = arith.mulf %17, %21 : vector<8x128xf32>
    %c0_13 = arith.constant 0 : index
    %c0_14 = arith.constant 0 : index
    %23 = vector.load %arg6[%c0_13, %c0_14] : memref<8x128xf32, #tpu.memory_space<vmem>>, vector<8x128xf32>
    tpu.vector_store %arg6[%c0_13, %c0_14], %22 {strides = array<i32>} : memref<8x128xf32, #tpu.memory_space<vmem>>, vector<8x128xf32>,
    return
  }
  func.func @transform_0(%arg0: i32) -> (i32, i32) {
    %c0_i32 = arith.constant 0 : i32
    %c0_i32_0 = arith.constant 0 : i32
    return %arg0, %c0_i32 : i32, i32
  }
  func.func @transform_1(%arg0: i32) -> (i32, i32) {
    %c0_i32 = arith.constant 0 : i32
    %c0_i32_0 = arith.constant 0 : i32
    %c0_i32_1 = arith.constant 0 : i32
    return %c0_i32, %c0_i32_0 : i32, i32
  }
  func.func @transform_2(%arg0: i32) -> (i32, i32) {
    %c0_i32 = arith.constant 0 : i32
    %c0_i32_0 = arith.constant 0 : i32
    %c0_i32_1 = arith.constant 0 : i32
    return %c0_i32, %c0_i32_0 : i32, i32
  }
  func.func @transform_3(%arg0: i32) -> (i32, i32) {
    %c0_i32 = arith.constant 0 : i32
    %c0_i32_0 = arith.constant 0 : i32
    %c0_i32_1 = arith.constant 0 : i32
    return %c0_i32, %c0_i32_0 : i32, i32
  }
  func.func @transform_4(%arg0: i32) -> (i32, i32) {
    %c0_i32 = arith.constant 0 : i32
    %c0_i32_0 = arith.constant 0 : i32
    %c0_i32_1 = arith.constant 0 : i32
    return %c0_i32, %c0_i32_0 : i32, i32
  }
  func.func @transform_5(%arg0: i32) -> (i32, i32) {
    %c0_i32 = arith.constant 0 : i32
    %c0_i32_0 = arith.constant 0 : i32
    return %arg0, %c0_i32 : i32, i32
  }
}

</mosaic_0001>

<llo_original>
// kernel: policy_net_forward.1
$region0: #{policy_net_forward.1}
  #allocation0 [shape = 'u32[]', space=smem, size = 0x4, offset = 0x4, fixed_abs, tag = 'smem constant byte address 0x4 - core index']
  #allocation1 [shape = 'u32[144,128]{1,0:T(1,128)}', space=vmem, size = 0x12000, scoped, tag = 'internal scratch']
  %s0 = inlined_call_operand.vmem [shape: f32[8,8], index: 0, kind: input, shape index: {}]
  %s1 = inlined_call_operand.vmem [shape: f32[8,64], index: 1, kind: input, shape index: {}]
  %s2 = inlined_call_operand.vmem [shape: f32[1,64], index: 2, kind: input, shape index: {}]
  %s3 = inlined_call_operand.hbm [shape: f32[64,128], index: 3, kind: input, shape index: {}]
  %s4 = inlined_call_operand.vmem [shape: f32[1,128], index: 4, kind: input, shape index: {}]
  %s5 = inlined_call_operand.vmem [shape: f32[8,128], index: 5, kind: output, shape index: {}]
  %s6 = sld [smem:[#allocation0]]
  $region34: #{policy_net_forward.1} parent=0
    _
  %s8 = ssub.s32 1, %s6
  %s9 = scalar_select 0, %s8, %s6
  $region1: #{policy_net_forward.1} parent=0
    #allocation2 [shape = 'u8[32768]{0}', space=vmem, size = 0x8000, scoped, tag = 'input window, operand 3, single buffered']
    #allocation3 [shape = 's32[1]{0}', space=sflag, size = 0x4, scoped, tag = 'scoped memory for policy_net_forward.1']
    %10 = vsyncpa [#allocation3], 0
    // Predicated region
    $region2: #{policy_net_forward.1} parent=1 // pred_check
      _
    $region3: #{policy_net_forward.1} parent=1 // pred_check_branch
      %12 = sbr.rel (0) target = $region5
    $region4: #{policy_net_forward.1} parent=1 // pred_region
      _
    $region5: #{policy_net_forward.1} parent=1 // pred_fallthru
      _
    // Predicated region
    $region6: #{policy_net_forward.1} parent=1 // pred_check
      _
    $region7: #{policy_net_forward.1} parent=1 // pred_check_branch
      %14 = sbr.rel (0) target = $region9
    $region8: #{policy_net_forward.1} parent=1 // pred_region
      _
    $region9: #{policy_net_forward.1} parent=1 // pred_fallthru
      _
    // Predicated region
    $region10: #{policy_net_forward.1} parent=1 // pred_check
      _
    $region11: #{policy_net_forward.1} parent=1 // pred_check_branch
      %16 = sbr.rel (0) target = $region13
    $region12: #{policy_net_forward.1} parent=1 // pred_region
      _
    $region13: #{policy_net_forward.1} parent=1 // pred_fallthru
      _
    // Predicated region
    $region14: #{policy_net_forward.1} parent=1 // pred_check
      _
    $region15: #{policy_net_forward.1} parent=1 // pred_check_branch
      %18 = sbr.rel (0) target = $region17
    $region16: #{policy_net_forward.1} parent=1 // pred_region
      %s20 = ssub.s32 1024, 1024
      %21 = vsyncadd [#allocation3], %s20
      %s22 = sshll.u32 [#allocation2], 4
      %s23 = int_to_ptr.vmem [resolvable:$true] %s22
      %28 = dma.hbm_to_vmem [thread:$0]  %s3, 1024, %s23, [#allocation3], 128, 128, 8
    $region17: #{policy_net_forward.1} parent=1 // pred_fallthru
      _
    // Predicated region
    $region18: #{policy_net_forward.1} parent=1 // pred_check
      _
    $region19: #{policy_net_forward.1} parent=1 // pred_check_branch
      %30 = sbr.rel (0) target = $region21
    $region20: #{policy_net_forward.1} parent=1 // pred_region
      _
    $region21: #{policy_net_forward.1} parent=1 // pred_fallthru
      _
    // Predicated region
    $region22: #{policy_net_forward.1} parent=1 // pred_check
      _
    $region23: #{policy_net_forward.1} parent=1 // pred_check_branch
      %32 = sbr.rel (0) target = $region25
    $region24: #{policy_net_forward.1} parent=1 // pred_region
      %33 = dma.done [#allocation3], 1024
    $region25: #{policy_net_forward.1} parent=1 // pred_fallthru
      _
    %v34 = vld [vmem:[%s0] sm:$0xff]
    %v35 = vld [vmem:[%s1] sm:$0xff]
    %v36 = vld [vmem:[%s2] sm:$0x1]
    %v38 = vlaneseq
    %v39 = vshrl.u32 %v38, 7
    %v40 = vsub.s32 0, %v39
    %v41 = vrot.slane %v36, %v40
    %vm43 = vcmask 64512
    %v45 = vsel %vm43, %v34, 0
    %47 = vmatprep.subr.mxu0 0.0
    %48 = vmatpush1.msra.mxu0 %v35
    %49 = vmatprep.subr.mxu0 0.0
    %50 = vmatpush1.msra.mxu0 0.0
    %51 = vmatprep.subr.mxu0 0.0
    %52 = vmatpush1.msra.mxu0 0.0
    %53 = vmatprep.subr.mxu0 0.0
    %54 = vmatpush1.msra.mxu0 0.0
    %55 = vmatprep.subr.mxu0 0.0
    %56 = vmatpush1.msra.mxu0 0.0
    %57 = vmatprep.subr.mxu0 0.0
    %58 = vmatpush1.msra.mxu0 0.0
    %59 = vmatprep.subr.mxu0 0.0
    %60 = vmatpush1.msra.mxu0 0.0
    %61 = vmatprep.subr.mxu0 0.0
    %62 = vmatpush1.msra.mxu0 0.0
    %63 = vmatprep.subr.mxu0 0.0
    %64 = vmatpush1.msra.mxu0 0.0
    %65 = vmatprep.subr.mxu0 0.0
    %66 = vmatpush1.msra.mxu0 0.0
    %67 = vmatprep.subr.mxu0 0.0
    %68 = vmatpush1.msra.mxu0 0.0
    %69 = vmatprep.subr.mxu0 0.0
    %70 = vmatpush1.msra.mxu0 0.0
    %71 = vmatprep.subr.mxu0 0.0
    %72 = vmatpush1.msra.mxu0 0.0
    %73 = vmatprep.subr.mxu0 0.0
    %74 = vmatpush1.msra.mxu0 0.0
    %75 = vmatprep.subr.mxu0 0.0
    %76 = vmatpush1.msra.mxu0 0.0
    %77 = vmatprep.subr.mxu0 0.0
    %78 = vmatpush1.msra.mxu0 0.0
    %79 = vmatprep.subr.mxu0 0.0
    %80 = vmatpush1.msra.mxu0 0.0
    %81 = vmatprep.subr.mxu0 0.0
    %82 = vmatpush1.msra.mxu0 0.0
    %83 = vmatprep.subr.mxu0 0.0
    %84 = vmatpush1.msra.mxu0 0.0
    %85 = vmatprep.subr.mxu0 0.0
    %86 = vmatpush1.msra.mxu0 0.0
    %87 = vmatprep.subr.mxu0 0.0
    %88 = vmatpush1.msra.mxu0 0.0
    %89 = vmatprep.subr.mxu0 0.0
    %90 = vmatpush1.msra.mxu0 0.0
    %91 = vmatprep.subr.mxu0 0.0
    %92 = vmatpush1.msra.mxu0 0.0
    %93 = vmatprep.subr.mxu0 0.0
    %94 = vmatpush1.msra.mxu0 0.0
    %95 = vmatprep.subr.mxu0 0.0
    %96 = vmatpush1.msra.mxu0 0.0
    %97 = vmatprep.subr.mxu0 0.0
    %98 = vmatpush1.msra.mxu0 0.0
    %99 = vmatprep.subr.mxu0 0.0
    %100 = vmatpush1.msra.mxu0 0.0
    %101 = vmatprep.subr.mxu0 0.0
    %102 = vmatpush1.msra.mxu0 0.0
    %103 = vmatprep.subr.mxu0 0.0
    %104 = vmatpush1.msra.mxu0 0.0
    %105 = vmatprep.subr.mxu0 0.0
    %106 = vmatpush1.msra.mxu0 0.0
    %107 = vmatprep.subr.mxu0 0.0
    %108 = vmatpush1.msra.mxu0 0.0
    %109 = vmatprep.subr.mxu0 0.0
    %110 = vmatpush1.msra.mxu0 0.0
    %111 = vmatprep.mubr.f32.mxu0 0.0
    %112 = vmatmul.mubr.f32.gmra.mrb[0].mxu0 %v45
    %v113 = vpop.f32.mrb[0].mxu0
    %v114 = vadd.f32 %v41, %v113
    %v115 = vpop.f32.mrb[0].mxu0
    %116 = vdwg.mxu0
    %v117 = vmax.f32 %v114, 0.0
    %v118 = vld [vmem:[#allocation2] sm:$0xff]
    %v119 = vld [vmem:[#allocation2 + $0x8] sm:$0xff]
    %v120 = vld [vmem:[#allocation2 + $0x10] sm:$0xff]
    %v121 = vld [vmem:[#allocation2 + $0x18] sm:$0xff]
    %v122 = vld [vmem:[#allocation2 + $0x20] sm:$0xff]
    %v123 = vld [vmem:[#allocation2 + $0x28] sm:$0xff]
    %v124 = vld [vmem:[#allocation2 + $0x30] sm:$0xff]
    %v125 = vld [vmem:[#allocation2 + $0x38] sm:$0xff]
    %v126 = vld [vmem:[%s4] sm:$0x1]
    %v128 = vlaneseq
    %v129 = vshrl.u32 %v128, 7
    %v130 = vsub.s32 0, %v129
    %v131 = vrot.slane %v126, %v130
    %vm133 = vcmask 523264
    %v135 = vsel %vm133, %v117, 0
    %137 = vmatprep.subr.mxu0 0.0
    %138 = vmatpush1.msra.mxu0 %v118
    %139 = vmatprep.subr.mxu0 0.0
    %140 = vmatpush1.msra.mxu0 %v119
    %141 = vmatprep.subr.mxu0 0.0
    %142 = vmatpush1.msra.mxu0 %v120
    %143 = vmatprep.subr.mxu0 0.0
    %144 = vmatpush1.msra.mxu0 %v121
    %145 = vmatprep.subr.mxu0 0.0
    %146 = vmatpush1.msra.mxu0 %v122
    %147 = vmatprep.subr.mxu0 0.0
    %148 = vmatpush1.msra.mxu0 %v123
    %149 = vmatprep.subr.mxu0 0.0
    %150 = vmatpush1.msra.mxu0 %v124
    %151 = vmatprep.subr.mxu0 0.0
    %152 = vmatpush1.msra.mxu0 %v125
    %153 = vmatprep.subr.mxu0 0.0
    %154 = vmatpush1.msra.mxu0 0.0
    %155 = vmatprep.subr.mxu0 0.0
    %156 = vmatpush1.msra.mxu0 0.0
    %157 = vmatprep.subr.mxu0 0.0
    %158 = vmatpush1.msra.mxu0 0.0
    %159 = vmatprep.subr.mxu0 0.0
    %160 = vmatpush1.msra.mxu0 0.0
    %161 = vmatprep.subr.mxu0 0.0
    %162 = vmatpush1.msra.mxu0 0.0
    %163 = vmatprep.subr.mxu0 0.0
    %164 = vmatpush1.msra.mxu0 0.0
    %165 = vmatprep.subr.mxu0 0.0
    %166 = vmatpush1.msra.mxu0 0.0
    %167 = vmatprep.subr.mxu0 0.0
    %168 = vmatpush1.msra.mxu0 0.0
    %169 = vmatprep.subr.mxu0 0.0
    %170 = vmatpush1.msra.mxu0 0.0
    %171 = vmatprep.subr.mxu0 0.0
    %172 = vmatpush1.msra.mxu0 0.0
    %173 = vmatprep.subr.mxu0 0.0
    %174 = vmatpush1.msra.mxu0 0.0
    %175 = vmatprep.subr.mxu0 0.0
    %176 = vmatpush1.msra.mxu0 0.0
    %177 = vmatprep.subr.mxu0 0.0
    %178 = vmatpush1.msra.mxu0 0.0
    %179 = vmatprep.subr.mxu0 0.0
    %180 = vmatpush1.msra.mxu0 0.0
    %181 = vmatprep.subr.mxu0 0.0
    %182 = vmatpush1.msra.mxu0 0.0
    %183 = vmatprep.subr.mxu0 0.0
    %184 = vmatpush1.msra.mxu0 0.0
    %185 = vmatprep.subr.mxu0 0.0
    %186 = vmatpush1.msra.mxu0 0.0
    %187 = vmatprep.subr.mxu0 0.0
    %188 = vmatpush1.msra.mxu0 0.0
    %189 = vmatprep.subr.mxu0 0.0
    %190 = vmatpush1.msra.mxu0 0.0
    %191 = vmatprep.subr.mxu0 0.0
    %192 = vmatpush1.msra.mxu0 0.0
    %193 = vmatprep.subr.mxu0 0.0
    %194 = vmatpush1.msra.mxu0 0.0
    %195 = vmatprep.subr.mxu0 0.0
    %196 = vmatpush1.msra.mxu0 0.0
    %197 = vmatprep.subr.mxu0 0.0
    %198 = vmatpush1.msra.mxu0 0.0
    %199 = vmatprep.subr.mxu0 0.0
    %200 = vmatpush1.msra.mxu0 0.0
    %201 = vmatprep.mubr.f32.mxu0 0.0
    %202 = vmatmul.mubr.f32.gmra.mrb[0].mxu0 %v135
    %v203 = vpop.f32.mrb[0].mxu0
    %v204 = vadd.f32 %v131, %v203
    %v205 = vpop.f32.mrb[0].mxu0
    %206 = vdwg.mxu0
    %207 = vmax.xlane.f32.xlu0 %v204
    %v208 = vpop.xlane.xlu0 %207
    %v209 = vsub.f32 %v204, %v208
    %v210 = vmul.f32 %v209, 1.442695
    %v211 = vpow.pop %v210
    %212 = vadd.xlane.f32.xlu0 %v211
    %v213 = vpop.xlane.xlu0 %212
    %v214 = vrcp.pop %v213
    %v215 = vmul.f32 %v211, %v214
    %216 = vst [vmem:[%s5] sm:$0xff] %v215
    // Predicated region
    $region26: #{policy_net_forward.1} parent=1 // pred_check
      _
    $region27: #{policy_net_forward.1} parent=1 // pred_check_branch
      %218 = sbr.rel (0) target = $region29
    $region28: #{policy_net_forward.1} parent=1 // pred_region
      _
    $region29: #{policy_net_forward.1} parent=1 // pred_fallthru
      _
    // Predicated region
    $region30: #{policy_net_forward.1} parent=1 // pred_check
      _
    $region31: #{policy_net_forward.1} parent=1 // pred_check_branch
      %220 = sbr.rel (0) target = $region33
    $region32: #{policy_net_forward.1} parent=1 // pred_region
      _
    $region33: #{policy_net_forward.1} parent=1 // pred_fallthru
      _
    %221 = vsyncpa [#allocation3], 1

</llo_original>
